<compile_context>
chip_gen: v7x
topology: tpu7x:2x2x1
jax: 0.10.0
libtpu: 0.0.40
codegen_flags: <defaults>
</compile_context>

<pallas_src>
import jax
import jax.numpy as jnp
from jax.experimental import pallas as pl
from jax.experimental.pallas import tpu as pltpu

LN_EPS = 1e-5  # PyTorch nn.LayerNorm default


def _linear_ln_relu(h, w_bf16, b, gamma, beta):
    """relu(LayerNorm(h @ w + b)) with bf16 MXU operands, f32 accumulate/LN."""
    y = jnp.dot(h.astype(jnp.bfloat16), w_bf16,
                preferred_element_type=jnp.float32) + b
    mu = jnp.mean(y, axis=-1, keepdims=True)
    var = jnp.mean(jnp.square(y - mu), axis=-1, keepdims=True)
    scale = gamma * jax.lax.rsqrt(var + LN_EPS)        # fused gamma * inv_std
    return jnp.maximum((y - mu) * scale + beta, 0.0)


def actor_kernel(
    x_ref,
    w1_ref, b1_ref, g1_ref, be1_ref,
    w2_ref, b2_ref, g2_ref, be2_ref,
    wmu_ref, bmu_ref,
    out_ref,
):
    x = x_ref[...]

    h = _linear_ln_relu(x, w1_ref[...], b1_ref[...], g1_ref[...], be1_ref[...])
    h = _linear_ln_relu(h, w2_ref[...], b2_ref[...], g2_ref[...], be2_ref[...])

    # mu head: VPU multiply + XLU lane-reduction per output column instead of a
    # narrow-N MXU matmul (keeps the MXU drain off the critical path).
    wmu = wmu_ref[...]                       # [A, H] f32 (torch [out, in] layout)
    A = wmu.shape[0]
    col = jax.lax.broadcasted_iota(jnp.int32, out_ref.shape, 1)   # [TB, A]
    mu = jnp.broadcast_to(bmu_ref[...], out_ref.shape)            # [TB, A]
    for j in range(A):                       # A is tiny & static -> unrolled
        cj = jnp.sum(h * wmu[j:j + 1, :], axis=-1, keepdims=True)  # [TB, 1]
        mu = mu + jnp.where(col == j, cj, 0.0)

    out_ref[...] = jnp.tanh(mu).astype(out_ref.dtype)


def actor_forward(inputs, params, *, max_tile_b=256):
    """inputs: [B, num_inputs] -> mu: [B, action_space]."""
    x = inputs.astype(jnp.float32)
    B, num_inputs = x.shape
    H = params["w1"].shape[1]
    A = params["w_mu"].shape[0]

    tile_b = B if B <= max_tile_b else max_tile_b
    assert B % tile_b == 0, "demo keeps the batch a multiple of the tile"
    grid = (B // tile_b,)

    operands = (
        x,
        params["w1"], params["b1"], params["g1"], params["be1"],
        params["w2"], params["b2"], params["g2"], params["be2"],
        params["w_mu"], params["b_mu"],
    )

    def full_spec(arr):                       # whole (tiny) param resident in VMEM
        return pl.BlockSpec(arr.shape, lambda i: (0, 0))

    in_specs = [pl.BlockSpec((tile_b, num_inputs), lambda i: (i, 0))]
    in_specs += [full_spec(p) for p in operands[1:]]

    return pl.pallas_call(
        actor_kernel,
        out_shape=jax.ShapeDtypeStruct((B, A), jnp.float32),
        grid=grid,
        in_specs=in_specs,
        out_specs=pl.BlockSpec((tile_b, A), lambda i: (i, 0)),
        compiler_params=pltpu.CompilerParams(
            dimension_semantics=("parallel",)),   # shards batch across v7x TCs
    )(*operands)


def init_params(key, hidden_size, num_inputs, action_space):
    """Deterministic PyTorch-style (uniform fan-in) synthetic parameters."""

    def linear_init(k, fan_in, fan_out):
        kw, kb = jax.random.split(k)
        bound = 1.0 / jnp.sqrt(jnp.float32(fan_in))
        w = jax.random.uniform(kw, (fan_in, fan_out), jnp.float32, -bound, bound)
        b = jax.random.uniform(kb, (1, fan_out), jnp.float32, -bound, bound)
        return w, b

    k1, k2, km = jax.random.split(key, 3)
    w1, b1 = linear_init(k1, num_inputs, hidden_size)
    w2, b2 = linear_init(k2, hidden_size, hidden_size)
    wmu, bmu = linear_init(km, hidden_size, action_space)

    ones = jnp.ones((1, hidden_size), jnp.float32)
    zeros = jnp.zeros((1, hidden_size), jnp.float32)
    return {
        # hidden-layer weights stored [in, out] and pre-cast to bf16 (MXU path)
        "w1": w1.astype(jnp.bfloat16), "b1": b1, "g1": ones, "be1": zeros,
        "w2": w2.astype(jnp.bfloat16), "b2": b2, "g2": ones, "be2": zeros,
        # mu head kept f32, stored [out, in] for the per-row VPU reduction
        "w_mu": wmu.T, "b_mu": bmu,
    }


def _reference_forward(inputs, params):
    """Pure-JAX reference with identical casting semantics."""
    x = inputs.astype(jnp.float32)

    def block(h, w_bf16, b, g, be):
        y = jnp.dot(h.astype(jnp.bfloat16), w_bf16,
                    preferred_element_type=jnp.float32) + b
        mu = jnp.mean(y, axis=-1, keepdims=True)
        var = jnp.mean((y - mu) ** 2, axis=-1, keepdims=True)
        return jnp.maximum((y - mu) / jnp.sqrt(var + LN_EPS) * g + be, 0.0)

    h = block(x, params["w1"], params["b1"], params["g1"], params["be1"])
    h = block(h, params["w2"], params["b2"], params["g2"], params["be2"])
    return jnp.tanh(h @ params["w_mu"].T + params["b_mu"])


if __name__ == "__main__":
    hidden_size = 32
    num_inputs = 5
    action_space = 3
    batch = 8

    key = jax.random.PRNGKey(0)
    k_par, k_in = jax.random.split(key)

    params = init_params(k_par, hidden_size, num_inputs, action_space)
    inputs = jax.random.normal(k_in, (batch, num_inputs), jnp.float32)

    mu = actor_forward(inputs, params)
    jax.block_until_ready(mu)

    mu_ref = _reference_forward(inputs, params)
    assert mu.shape == (batch, action_space)
    assert jnp.allclose(mu, mu_ref, atol=1e-3, rtol=1e-3)
    assert bool(jnp.all(jnp.abs(mu) <= 1.0))  # tanh range sanity check

    print("KERNEL_OK")
</pallas_src>

<mosaic_0001>
module attributes {stable_mosaic.version = 11 : i64} {
  func.func @actor_kernel(%arg0: i32, %arg1: memref<8x5xf32, #tpu.memory_space<vmem>>, %arg2: memref<5x32xbf16, #tpu.memory_space<vmem>>, %arg3: memref<1x32xf32, #tpu.memory_space<vmem>>, %arg4: memref<1x32xf32, #tpu.memory_space<vmem>>, %arg5: memref<1x32xf32, #tpu.memory_space<vmem>>, %arg6: memref<32x32xbf16, #tpu.memory_space<vmem>>, %arg7: memref<1x32xf32, #tpu.memory_space<vmem>>, %arg8: memref<1x32xf32, #tpu.memory_space<vmem>>, %arg9: memref<1x32xf32, #tpu.memory_space<vmem>>, %arg10: memref<3x32xf32, #tpu.memory_space<vmem>>, %arg11: memref<1x3xf32, #tpu.memory_space<vmem>>, %arg12: memref<8x3xf32, #tpu.memory_space<vmem>>) attributes {dimension_semantics = [#tpu.dimension_semantics<parallel>], iteration_bounds = array<i64: 1>, scalar_prefetch = 0 : i64, scratch_operands = 0 : i64, tpu.core_type = #tpu.core_type<tc>, window_params = [{transform_indices = @transform_0, window_bounds = array<i64: 8, 5>}, {pipeline_mode = #tpu.pipeline_mode<synchronous>, transform_indices = @transform_1, window_bounds = array<i64: 5, 32>}, {pipeline_mode = #tpu.pipeline_mode<synchronous>, transform_indices = @transform_2, window_bounds = array<i64: 1, 32>}, {pipeline_mode = #tpu.pipeline_mode<synchronous>, transform_indices = @transform_3, window_bounds = array<i64: 1, 32>}, {pipeline_mode = #tpu.pipeline_mode<synchronous>, transform_indices = @transform_4, window_bounds = array<i64: 1, 32>}, {pipeline_mode = #tpu.pipeline_mode<synchronous>, transform_indices = @transform_5, window_bounds = array<i64: 32, 32>}, {pipeline_mode = #tpu.pipeline_mode<synchronous>, transform_indices = @transform_6, window_bounds = array<i64: 1, 32>}, {pipeline_mode = #tpu.pipeline_mode<synchronous>, transform_indices = @transform_7, window_bounds = array<i64: 1, 32>}, {pipeline_mode = #tpu.pipeline_mode<synchronous>, transform_indices = @transform_8, window_bounds = array<i64: 1, 32>}, {pipeline_mode = #tpu.pipeline_mode<synchronous>, transform_indices = @transform_9, window_bounds = array<i64: 3, 32>}, {pipeline_mode = #tpu.pipeline_mode<synchronous>, transform_indices = @transform_10, window_bounds = array<i64: 1, 3>}, {transform_indices = @transform_11, window_bounds = array<i64: 8, 3>}]} {
    %c0 = arith.constant 0 : index
    %c0_0 = arith.constant 0 : index
    %0 = vector.load %arg1[%c0, %c0_0] : memref<8x5xf32, #tpu.memory_space<vmem>>, vector<8x5xf32>
    %c0_1 = arith.constant 0 : index
    %c0_2 = arith.constant 0 : index
    %1 = vector.load %arg2[%c0_1, %c0_2] : memref<5x32xbf16, #tpu.memory_space<vmem>>, vector<5x32xbf16>
    %c0_3 = arith.constant 0 : index
    %c0_4 = arith.constant 0 : index
    %2 = vector.load %arg3[%c0_3, %c0_4] : memref<1x32xf32, #tpu.memory_space<vmem>>, vector<1x32xf32>
    %c0_5 = arith.constant 0 : index
    %c0_6 = arith.constant 0 : index
    %3 = vector.load %arg4[%c0_5, %c0_6] : memref<1x32xf32, #tpu.memory_space<vmem>>, vector<1x32xf32>
    %c0_7 = arith.constant 0 : index
    %c0_8 = arith.constant 0 : index
    %4 = vector.load %arg5[%c0_7, %c0_8] : memref<1x32xf32, #tpu.memory_space<vmem>>, vector<1x32xf32>
    %5 = arith.truncf %0 : vector<8x5xf32> to vector<8x5xbf16>
    %cst = arith.constant dense<0.000000e+00> : vector<8x32xf32>
    %6 = tpu.matmul %5, %1, %cst {dimension_numbers = #tpu.dot_dimension_numbers<[1], [0], [0], [1], [0, 0, 1, 1], [], []>} : vector<8x5xbf16>, vector<5x32xbf16>, vector<8x32xf32> -> vector<8x32xf32>
    %7 = vector.broadcast %2 : vector<1x32xf32> to vector<8x32xf32>
    %8 = arith.addf %6, %7 : vector<8x32xf32>
    %cst_9 = arith.constant dense<0.000000e+00> : vector<8xf32>
    %9 = vector.multi_reduction <add>, %8, %cst_9 [1] : vector<8x32xf32> to vector<8xf32>
    %10 = vector.shape_cast %9 : vector<8xf32> to vector<8x1xf32>
    %cst_10 = arith.constant 3.200000e+01 : f32
    %11 = vector.broadcast %cst_10 : f32 to vector<8x1xf32>
    %12 = arith.divf %10, %11 : vector<8x1xf32>
    %13 = vector.broadcast %12 : vector<8x1xf32> to vector<8x32xf32>
    %14 = arith.subf %8, %13 : vector<8x32xf32>
    %15 = arith.mulf %14, %14 : vector<8x32xf32>
    %cst_11 = arith.constant dense<0.000000e+00> : vector<8xf32>
    %16 = vector.multi_reduction <add>, %15, %cst_11 [1] : vector<8x32xf32> to vector<8xf32>
    %17 = vector.shape_cast %16 : vector<8xf32> to vector<8x1xf32>
    %cst_12 = arith.constant 3.200000e+01 : f32
    %18 = vector.broadcast %cst_12 : f32 to vector<8x1xf32>
    %19 = arith.divf %17, %18 : vector<8x1xf32>
    %cst_13 = arith.constant 9.99999974E-6 : f32
    %20 = vector.broadcast %cst_13 : f32 to vector<8x1xf32>
    %21 = arith.addf %19, %20 : vector<8x1xf32>
    %22 = math.rsqrt %21 : vector<8x1xf32>
    %23 = vector.broadcast %3 : vector<1x32xf32> to vector<8x32xf32>
    %24 = vector.broadcast %22 : vector<8x1xf32> to vector<8x32xf32>
    %25 = arith.mulf %23, %24 : vector<8x32xf32>
    %26 = vector.broadcast %12 : vector<8x1xf32> to vector<8x32xf32>
    %27 = arith.subf %8, %26 : vector<8x32xf32>
    %28 = arith.mulf %27, %25 : vector<8x32xf32>
    %29 = vector.broadcast %4 : vector<1x32xf32> to vector<8x32xf32>
    %30 = arith.addf %28, %29 : vector<8x32xf32>
    %cst_14 = arith.constant 0.000000e+00 : f32
    %31 = vector.broadcast %cst_14 : f32 to vector<8x32xf32>
    %32 = arith.maximumf %30, %31 : vector<8x32xf32>
    %c0_15 = arith.constant 0 : index
    %c0_16 = arith.constant 0 : index
    %33 = vector.load %arg6[%c0_15, %c0_16] : memref<32x32xbf16, #tpu.memory_space<vmem>>, vector<32x32xbf16>
    %c0_17 = arith.constant 0 : index
    %c0_18 = arith.constant 0 : index
    %34 = vector.load %arg7[%c0_17, %c0_18] : memref<1x32xf32, #tpu.memory_space<vmem>>, vector<1x32xf32>
    %c0_19 = arith.constant 0 : index
    %c0_20 = arith.constant 0 : index
    %35 = vector.load %arg8[%c0_19, %c0_20] : memref<1x32xf32, #tpu.memory_space<vmem>>, vector<1x32xf32>
    %c0_21 = arith.constant 0 : index
    %c0_22 = arith.constant 0 : index
    %36 = vector.load %arg9[%c0_21, %c0_22] : memref<1x32xf32, #tpu.memory_space<vmem>>, vector<1x32xf32>
    %37 = arith.truncf %32 : vector<8x32xf32> to vector<8x32xbf16>
    %cst_23 = arith.constant dense<0.000000e+00> : vector<8x32xf32>
    %38 = tpu.matmul %37, %33, %cst_23 {dimension_numbers = #tpu.dot_dimension_numbers<[1], [0], [0], [1], [0, 0, 1, 1], [], []>} : vector<8x32xbf16>, vector<32x32xbf16>, vector<8x32xf32> -> vector<8x32xf32>
    %39 = vector.broadcast %34 : vector<1x32xf32> to vector<8x32xf32>
    %40 = arith.addf %38, %39 : vector<8x32xf32>
    %cst_24 = arith.constant dense<0.000000e+00> : vector<8xf32>
    %41 = vector.multi_reduction <add>, %40, %cst_24 [1] : vector<8x32xf32> to vector<8xf32>
    %42 = vector.shape_cast %41 : vector<8xf32> to vector<8x1xf32>
    %cst_25 = arith.constant 3.200000e+01 : f32
    %43 = vector.broadcast %cst_25 : f32 to vector<8x1xf32>
    %44 = arith.divf %42, %43 : vector<8x1xf32>
    %45 = vector.broadcast %44 : vector<8x1xf32> to vector<8x32xf32>
    %46 = arith.subf %40, %45 : vector<8x32xf32>
    %47 = arith.mulf %46, %46 : vector<8x32xf32>
    %cst_26 = arith.constant dense<0.000000e+00> : vector<8xf32>
    %48 = vector.multi_reduction <add>, %47, %cst_26 [1] : vector<8x32xf32> to vector<8xf32>
    %49 = vector.shape_cast %48 : vector<8xf32> to vector<8x1xf32>
    %cst_27 = arith.constant 3.200000e+01 : f32
    %50 = vector.broadcast %cst_27 : f32 to vector<8x1xf32>
    %51 = arith.divf %49, %50 : vector<8x1xf32>
    %cst_28 = arith.constant 9.99999974E-6 : f32
    %52 = vector.broadcast %cst_28 : f32 to vector<8x1xf32>
    %53 = arith.addf %51, %52 : vector<8x1xf32>
    %54 = math.rsqrt %53 : vector<8x1xf32>
    %55 = vector.broadcast %35 : vector<1x32xf32> to vector<8x32xf32>
    %56 = vector.broadcast %54 : vector<8x1xf32> to vector<8x32xf32>
    %57 = arith.mulf %55, %56 : vector<8x32xf32>
    %58 = vector.broadcast %44 : vector<8x1xf32> to vector<8x32xf32>
    %59 = arith.subf %40, %58 : vector<8x32xf32>
    %60 = arith.mulf %59, %57 : vector<8x32xf32>
    %61 = vector.broadcast %36 : vector<1x32xf32> to vector<8x32xf32>
    %62 = arith.addf %60, %61 : vector<8x32xf32>
    %cst_29 = arith.constant 0.000000e+00 : f32
    %63 = vector.broadcast %cst_29 : f32 to vector<8x32xf32>
    %64 = arith.maximumf %62, %63 : vector<8x32xf32>
    %c0_30 = arith.constant 0 : index
    %c0_31 = arith.constant 0 : index
    %65 = vector.load %arg10[%c0_30, %c0_31] : memref<3x32xf32, #tpu.memory_space<vmem>>, vector<3x32xf32>
    %66 = tpu.iota {dimensions = array<i32: 1>} : vector<8x3xi32>
    %c0_32 = arith.constant 0 : index
    %c0_33 = arith.constant 0 : index
    %67 = vector.load %arg11[%c0_32, %c0_33] : memref<1x3xf32, #tpu.memory_space<vmem>>, vector<1x3xf32>
    %68 = vector.shape_cast %67 : vector<1x3xf32> to vector<1x3xf32>
    %69 = vector.broadcast %68 : vector<1x3xf32> to vector<8x3xf32>
    %70 = vector.extract_strided_slice %65 {offsets = [0, 0], sizes = [1, 32], strides = [1, 1]} : vector<3x32xf32> to vector<1x32xf32>
    %71 = vector.broadcast %70 : vector<1x32xf32> to vector<8x32xf32>
    %72 = arith.mulf %64, %71 : vector<8x32xf32>
    %cst_34 = arith.constant dense<0.000000e+00> : vector<8xf32>
    %73 = vector.multi_reduction <add>, %72, %cst_34 [1] : vector<8x32xf32> to vector<8xf32>
    %74 = vector.shape_cast %73 : vector<8xf32> to vector<8x1xf32>
    %c0_i32 = arith.constant 0 : i32
    %75 = vector.broadcast %c0_i32 : i32 to vector<8x3xi32>
    %76 = arith.cmpi eq, %66, %75 : vector<8x3xi32>
    %cst_35 = arith.constant 0.000000e+00 : f32
    %77 = vector.shape_cast %74 : vector<8x1xf32> to vector<8x1xf32>
    %78 = vector.broadcast %77 : vector<8x1xf32> to vector<8x3xf32>
    %79 = vector.broadcast %cst_35 : f32 to vector<8x3xf32>
    %80 = arith.select %76, %78, %79 : vector<8x3xi1>, vector<8x3xf32>
    %81 = arith.addf %69, %80 : vector<8x3xf32>
    %82 = vector.extract_strided_slice %65 {offsets = [1, 0], sizes = [1, 32], strides = [1, 1]} : vector<3x32xf32> to vector<1x32xf32>
    %83 = vector.broadcast %82 : vector<1x32xf32> to vector<8x32xf32>
    %84 = arith.mulf %64, %83 : vector<8x32xf32>
    %cst_36 = arith.constant dense<0.000000e+00> : vector<8xf32>
    %85 = vector.multi_reduction <add>, %84, %cst_36 [1] : vector<8x32xf32> to vector<8xf32>
    %86 = vector.shape_cast %85 : vector<8xf32> to vector<8x1xf32>
    %c1_i32 = arith.constant 1 : i32
    %87 = vector.broadcast %c1_i32 : i32 to vector<8x3xi32>
    %88 = arith.cmpi eq, %66, %87 : vector<8x3xi32>
    %cst_37 = arith.constant 0.000000e+00 : f32
    %89 = vector.shape_cast %86 : vector<8x1xf32> to vector<8x1xf32>
    %90 = vector.broadcast %89 : vector<8x1xf32> to vector<8x3xf32>
    %91 = vector.broadcast %cst_37 : f32 to vector<8x3xf32>
    %92 = arith.select %88, %90, %91 : vector<8x3xi1>, vector<8x3xf32>
    %93 = arith.addf %81, %92 : vector<8x3xf32>
    %94 = vector.extract_strided_slice %65 {offsets = [2, 0], sizes = [1, 32], strides = [1, 1]} : vector<3x32xf32> to vector<1x32xf32>
    %95 = vector.broadcast %94 : vector<1x32xf32> to vector<8x32xf32>
    %96 = arith.mulf %64, %95 : vector<8x32xf32>
    %cst_38 = arith.constant dense<0.000000e+00> : vector<8xf32>
    %97 = vector.multi_reduction <add>, %96, %cst_38 [1] : vector<8x32xf32> to vector<8xf32>
    %98 = vector.shape_cast %97 : vector<8xf32> to vector<8x1xf32>
    %c2_i32 = arith.constant 2 : i32
    %99 = vector.broadcast %c2_i32 : i32 to vector<8x3xi32>
    %100 = arith.cmpi eq, %66, %99 : vector<8x3xi32>
    %cst_39 = arith.constant 0.000000e+00 : f32
    %101 = vector.shape_cast %98 : vector<8x1xf32> to vector<8x1xf32>
    %102 = vector.broadcast %101 : vector<8x1xf32> to vector<8x3xf32>
    %103 = vector.broadcast %cst_39 : f32 to vector<8x3xf32>
    %104 = arith.select %100, %102, %103 : vector<8x3xi1>, vector<8x3xf32>
    %105 = arith.addf %93, %104 : vector<8x3xf32>
    %106 = math.tanh %105 : vector<8x3xf32>
    %c0_40 = arith.constant 0 : index
    %c0_41 = arith.constant 0 : index
    %107 = vector.load %arg12[%c0_40, %c0_41] : memref<8x3xf32, #tpu.memory_space<vmem>>, vector<8x3xf32>
    tpu.vector_store %arg12[%c0_40, %c0_41], %106 {strides = array<i32>} : memref<8x3xf32, #tpu.memory_space<vmem>>, vector<8x3xf32>,
    return
  }
  func.func @transform_0(%arg0: i32) -> (i32, i32) {
    %c0_i32 = arith.constant 0 : i32
    %c0_i32_0 = arith.constant 0 : i32
    return %arg0, %c0_i32 : i32, i32
  }
  func.func @transform_1(%arg0: i32) -> (i32, i32) {
    %c0_i32 = arith.constant 0 : i32
    %c0_i32_0 = arith.constant 0 : i32
    %c0_i32_1 = arith.constant 0 : i32
    return %c0_i32, %c0_i32_0 : i32, i32
  }
  func.func @transform_2(%arg0: i32) -> (i32, i32) {
    %c0_i32 = arith.constant 0 : i32
    %c0_i32_0 = arith.constant 0 : i32
    %c0_i32_1 = arith.constant 0 : i32
    return %c0_i32, %c0_i32_0 : i32, i32
  }
  func.func @transform_3(%arg0: i32) -> (i32, i32) {
    %c0_i32 = arith.constant 0 : i32
    %c0_i32_0 = arith.constant 0 : i32
    %c0_i32_1 = arith.constant 0 : i32
    return %c0_i32, %c0_i32_0 : i32, i32
  }
  func.func @transform_4(%arg0: i32) -> (i32, i32) {
    %c0_i32 = arith.constant 0 : i32
    %c0_i32_0 = arith.constant 0 : i32
    %c0_i32_1 = arith.constant 0 : i32
    return %c0_i32, %c0_i32_0 : i32, i32
  }
  func.func @transform_5(%arg0: i32) -> (i32, i32) {
    %c0_i32 = arith.constant 0 : i32
    %c0_i32_0 = arith.constant 0 : i32
    %c0_i32_1 = arith.constant 0 : i32
    return %c0_i32, %c0_i32_0 : i32, i32
  }
  func.func @transform_6(%arg0: i32) -> (i32, i32) {
    %c0_i32 = arith.constant 0 : i32
    %c0_i32_0 = arith.constant 0 : i32
    %c0_i32_1 = arith.constant 0 : i32
    return %c0_i32, %c0_i32_0 : i32, i32
  }
  func.func @transform_7(%arg0: i32) -> (i32, i32) {
    %c0_i32 = arith.constant 0 : i32
    %c0_i32_0 = arith.constant 0 : i32
    %c0_i32_1 = arith.constant 0 : i32
    return %c0_i32, %c0_i32_0 : i32, i32
  }
  func.func @transform_8(%arg0: i32) -> (i32, i32) {
    %c0_i32 = arith.constant 0 : i32
    %c0_i32_0 = arith.constant 0 : i32
    %c0_i32_1 = arith.constant 0 : i32
    return %c0_i32, %c0_i32_0 : i32, i32
  }
  func.func @transform_9(%arg0: i32) -> (i32, i32) {
    %c0_i32 = arith.constant 0 : i32
    %c0_i32_0 = arith.constant 0 : i32
    %c0_i32_1 = arith.constant 0 : i32
    return %c0_i32, %c0_i32_0 : i32, i32
  }
  func.func @transform_10(%arg0: i32) -> (i32, i32) {
    %c0_i32 = arith.constant 0 : i32
    %c0_i32_0 = arith.constant 0 : i32
    %c0_i32_1 = arith.constant 0 : i32
    return %c0_i32, %c0_i32_0 : i32, i32
  }
  func.func @transform_11(%arg0: i32) -> (i32, i32) {
    %c0_i32 = arith.constant 0 : i32
    %c0_i32_0 = arith.constant 0 : i32
    return %arg0, %c0_i32 : i32, i32
  }
}

</mosaic_0001>

<llo_original>
// kernel: tpu_custom_call.1
$region0: #{tpu_custom_call.1}
  #allocation0 [shape = 'u32[]', space=smem, size = 0x4, offset = 0x4, fixed_abs, tag = 'smem constant byte address 0x4 - core index']
  #allocation1 [shape = 'u32[144,128]{1,0:T(1,128)}', space=vmem, size = 0x12000, scoped, tag = 'internal scratch']
  %s0 = inlined_call_operand.hbm [shape: f32[8,5], index: 0, kind: input, shape index: {}]
  %s1 = inlined_call_operand.hbm [shape: bf16[5,32], index: 1, kind: input, shape index: {}]
  %s2 = inlined_call_operand.vmem [shape: f32[1,32], index: 2, kind: input, shape index: {}]
  %s3 = inlined_call_operand.vmem [shape: f32[1,32], index: 3, kind: input, shape index: {}]
  %s4 = inlined_call_operand.hbm [shape: f32[1,32], index: 4, kind: input, shape index: {}]
  %s5 = inlined_call_operand.vmem [shape: bf16[32,32], index: 5, kind: input, shape index: {}]
  %s6 = inlined_call_operand.hbm [shape: f32[1,32], index: 6, kind: input, shape index: {}]
  %s7 = inlined_call_operand.vmem [shape: f32[1,32], index: 7, kind: input, shape index: {}]
  %s8 = inlined_call_operand.vmem [shape: f32[1,32], index: 8, kind: input, shape index: {}]
  %s9 = inlined_call_operand.vmem [shape: f32[3,32], index: 9, kind: input, shape index: {}]
  %s10 = inlined_call_operand.vmem [shape: f32[1,3], index: 10, kind: input, shape index: {}]
  %s11 = inlined_call_operand.vmem [shape: f32[8,3], index: 11, kind: output, shape index: {}]
  %s12 = sld [smem:[#allocation0]]
  $region70: #{tpu_custom_call.1} parent=0
    _
  %s14 = ssub.s32 1, %s12
  %s15 = scalar_select 0, %s14, %s12
  $region1: #{tpu_custom_call.1} parent=0
    #allocation2 [shape = 'u8[4096]{0}', space=vmem, size = 0x1000, scoped, tag = 'input window, operand 0, single buffered']
    #allocation3 [shape = 's32[1]{0}', space=sflag, size = 0x4, scoped, tag = 'scoped memory for tpu_custom_call.1']
    #allocation4 [shape = 'u8[2048]{0}', space=vmem, size = 0x800, scoped, tag = 'input window, operand 1, single buffered']
    #allocation5 [shape = 's32[1]{0}', space=sflag, size = 0x4, scoped, tag = 'scoped memory for tpu_custom_call.1']
    #allocation6 [shape = 'u8[512]{0}', space=vmem, size = 0x400, scoped, tag = 'input window, operand 4, single buffered']
    #allocation7 [shape = 'u8[512]{0}', space=vmem, size = 0x400, scoped, tag = 'input window, operand 6, single buffered']
    #allocation8 [shape = 's32[1]{0}', space=sflag, size = 0x4, scoped, tag = 'scoped memory for tpu_custom_call.1']
    %16 = vsyncpa [#allocation3], 0
    %17 = vsyncpa [#allocation5], 0
    %18 = vsyncpa [#allocation8], 0
    // Predicated region
    $region2: #{tpu_custom_call.1} parent=1 // pred_check
      _
    $region3: #{tpu_custom_call.1} parent=1 // pred_check_branch
      %20 = sbr.rel (0) target = $region5
    $region4: #{tpu_custom_call.1} parent=1 // pred_region
      %s22 = ssub.s32 128, 128
      %23 = vsyncadd [#allocation3], %s22
      %s25 = sshll.u32 [#allocation2], 4
      %s26 = int_to_ptr.vmem [resolvable:$true] %s25
      %28 = dma.hbm_to_vmem [thread:$0]  %s0, 128, %s26, [#allocation3]
    $region5: #{tpu_custom_call.1} parent=1 // pred_fallthru
      _
    // Predicated region
    $region6: #{tpu_custom_call.1} parent=1 // pred_check
      _
    $region7: #{tpu_custom_call.1} parent=1 // pred_check_branch
      %30 = sbr.rel (0) target = $region9
    $region8: #{tpu_custom_call.1} parent=1 // pred_region
      %s32 = ssub.s32 64, 64
      %33 = vsyncadd [#allocation5], %s32
      %s35 = sshll.u32 [#allocation4], 4
      %s36 = int_to_ptr.vmem [resolvable:$true] %s35
      %38 = dma.hbm_to_vmem [thread:$0]  %s1, 64, %s36, [#allocation5]
    $region9: #{tpu_custom_call.1} parent=1 // pred_fallthru
      _
    // Predicated region
    $region10: #{tpu_custom_call.1} parent=1 // pred_check
      _
    $region11: #{tpu_custom_call.1} parent=1 // pred_check_branch
      %40 = sbr.rel (0) target = $region13
    $region12: #{tpu_custom_call.1} parent=1 // pred_region
      _
    $region13: #{tpu_custom_call.1} parent=1 // pred_fallthru
      _
    // Predicated region
    $region14: #{tpu_custom_call.1} parent=1 // pred_check
      _
    $region15: #{tpu_custom_call.1} parent=1 // pred_check_branch
      %42 = sbr.rel (0) target = $region17
    $region16: #{tpu_custom_call.1} parent=1 // pred_region
      _
    $region17: #{tpu_custom_call.1} parent=1 // pred_fallthru
      _
    // Predicated region
    $region18: #{tpu_custom_call.1} parent=1 // pred_check
      _
    $region19: #{tpu_custom_call.1} parent=1 // pred_check_branch
      %44 = sbr.rel (0) target = $region21
    $region20: #{tpu_custom_call.1} parent=1 // pred_region
      %s46 = ssub.s32 16, 16
      %47 = vsyncadd [#allocation5], %s46
      %s49 = sshll.u32 [#allocation6], 4
      %s50 = int_to_ptr.vmem [resolvable:$true] %s49
      %52 = dma.hbm_to_vmem [thread:$0]  %s4, 16, %s50, [#allocation5]
    $region21: #{tpu_custom_call.1} parent=1 // pred_fallthru
      _
    // Predicated region
    $region22: #{tpu_custom_call.1} parent=1 // pred_check
      _
    $region23: #{tpu_custom_call.1} parent=1 // pred_check_branch
      %54 = sbr.rel (0) target = $region25
    $region24: #{tpu_custom_call.1} parent=1 // pred_region
      _
    $region25: #{tpu_custom_call.1} parent=1 // pred_fallthru
      _
    // Predicated region
    $region26: #{tpu_custom_call.1} parent=1 // pred_check
      _
    $region27: #{tpu_custom_call.1} parent=1 // pred_check_branch
      %56 = sbr.rel (0) target = $region29
    $region28: #{tpu_custom_call.1} parent=1 // pred_region
      %s58 = ssub.s32 16, 16
      %59 = vsyncadd [#allocation8], %s58
      %s61 = sshll.u32 [#allocation7], 4
      %s62 = int_to_ptr.vmem [resolvable:$true] %s61
      %64 = dma.hbm_to_vmem [thread:$0]  %s6, 16, %s62, [#allocation8]
    $region29: #{tpu_custom_call.1} parent=1 // pred_fallthru
      _
    // Predicated region
    $region30: #{tpu_custom_call.1} parent=1 // pred_check
      _
    $region31: #{tpu_custom_call.1} parent=1 // pred_check_branch
      %66 = sbr.rel (0) target = $region33
    $region32: #{tpu_custom_call.1} parent=1 // pred_region
      _
    $region33: #{tpu_custom_call.1} parent=1 // pred_fallthru
      _
    // Predicated region
    $region34: #{tpu_custom_call.1} parent=1 // pred_check
      _
    $region35: #{tpu_custom_call.1} parent=1 // pred_check_branch
      %68 = sbr.rel (0) target = $region37
    $region36: #{tpu_custom_call.1} parent=1 // pred_region
      _
    $region37: #{tpu_custom_call.1} parent=1 // pred_fallthru
      _
    // Predicated region
    $region38: #{tpu_custom_call.1} parent=1 // pred_check
      _
    $region39: #{tpu_custom_call.1} parent=1 // pred_check_branch
      %70 = sbr.rel (0) target = $region41
    $region40: #{tpu_custom_call.1} parent=1 // pred_region
      _
    $region41: #{tpu_custom_call.1} parent=1 // pred_fallthru
      _
    // Predicated region
    $region42: #{tpu_custom_call.1} parent=1 // pred_check
      _
    $region43: #{tpu_custom_call.1} parent=1 // pred_check_branch
      %72 = sbr.rel (0) target = $region45
    $region44: #{tpu_custom_call.1} parent=1 // pred_region
      _
    $region45: #{tpu_custom_call.1} parent=1 // pred_fallthru
      _
    // Predicated region
    $region46: #{tpu_custom_call.1} parent=1 // pred_check
      _
    $region47: #{tpu_custom_call.1} parent=1 // pred_check_branch
      %74 = sbr.rel (0) target = $region49
    $region48: #{tpu_custom_call.1} parent=1 // pred_region
      %75 = dma.done [#allocation3], 128
    $region49: #{tpu_custom_call.1} parent=1 // pred_fallthru
      _
    // Predicated region
    $region50: #{tpu_custom_call.1} parent=1 // pred_check
      _
    $region51: #{tpu_custom_call.1} parent=1 // pred_check_branch
      %77 = sbr.rel (0) target = $region53
    $region52: #{tpu_custom_call.1} parent=1 // pred_region
      %78 = dma.done [#allocation5], 64
    $region53: #{tpu_custom_call.1} parent=1 // pred_fallthru
      _
    // Predicated region
    $region54: #{tpu_custom_call.1} parent=1 // pred_check
      _
    $region55: #{tpu_custom_call.1} parent=1 // pred_check_branch
      %80 = sbr.rel (0) target = $region57
    $region56: #{tpu_custom_call.1} parent=1 // pred_region
      %81 = dma.done [#allocation5], 16
    $region57: #{tpu_custom_call.1} parent=1 // pred_fallthru
      _
    // Predicated region
    $region58: #{tpu_custom_call.1} parent=1 // pred_check
      _
    $region59: #{tpu_custom_call.1} parent=1 // pred_check_branch
      %83 = sbr.rel (0) target = $region61
    $region60: #{tpu_custom_call.1} parent=1 // pred_region
      %84 = dma.done [#allocation8], 16
    $region61: #{tpu_custom_call.1} parent=1 // pred_fallthru
      _
    %v86 = vld [vmem:[#allocation2] sm:$0xff]
    %v87 = vld [vmem:[#allocation4] sm:$0x7]
    %v88 = vld [vmem:[%s2] sm:$0x1]
    %v89 = vld [vmem:[%s3] sm:$0x1]
    %v90 = vld [vmem:[#allocation6] sm:$0x1]
    %v91 = vpack.c.bf16 %v86, %v86
    %v93 = vlaneseq
    %v94 = vshrl.u32 %v93, 7
    %v95 = vsub.s32 0, %v94
    %v96 = vrot.slane %v88, %v95
    %vm98 = vcmask 39936
    %v100 = vsel %vm98, %v91, 0
    %vm102 = vcmask 1041408
    %vm103 = vcmask 1042432
    %v104 = vsel %vm102, 4294967295, 65535
    %v105 = vsel %vm103, %v104, 0
    %v107 = vand.u32 %v87, %v105
    %109 = vmatprep.subr.bf16.mxu0 0
    %110 = vmatpush1.bf16.msra.mxu0 %v107
    %111 = vmatprep.subr.bf16.mxu0 0
    %112 = vmatpush1.bf16.msra.mxu0 0
    %113 = vmatprep.subr.bf16.mxu0 0
    %114 = vmatpush1.bf16.msra.mxu0 0
    %115 = vmatprep.subr.bf16.mxu0 0
    %116 = vmatpush1.bf16.msra.mxu0 0
    %117 = vmatprep.subr.bf16.mxu0 0
    %118 = vmatpush1.bf16.msra.mxu0 0
    %119 = vmatprep.subr.bf16.mxu0 0
    %120 = vmatpush1.bf16.msra.mxu0 0
    %121 = vmatprep.subr.bf16.mxu0 0
    %122 = vmatpush1.bf16.msra.mxu0 0
    %123 = vmatprep.subr.bf16.mxu0 0
    %124 = vmatpush1.bf16.msra.mxu0 0
    %125 = vmatprep.subr.bf16.mxu0 0
    %126 = vmatpush1.bf16.msra.mxu0 0
    %127 = vmatprep.subr.bf16.mxu0 0
    %128 = vmatpush1.bf16.msra.mxu0 0
    %129 = vmatprep.subr.bf16.mxu0 0
    %130 = vmatpush1.bf16.msra.mxu0 0
    %131 = vmatprep.subr.bf16.mxu0 0
    %132 = vmatpush1.bf16.msra.mxu0 0
    %133 = vmatprep.subr.bf16.mxu0 0
    %134 = vmatpush1.bf16.msra.mxu0 0
    %135 = vmatprep.subr.bf16.mxu0 0
    %136 = vmatpush1.bf16.msra.mxu0 0
    %137 = vmatprep.subr.bf16.mxu0 0
    %138 = vmatpush1.bf16.msra.mxu0 0
    %139 = vmatprep.subr.bf16.mxu0 0
    %140 = vmatpush1.bf16.msra.mxu0 0
    %141 = vmatprep.mubr.bf16.mxu0 0
    %142 = vmatmul.mubr.bf16.gmra.mrb[0].mxu0 %v100
    %v143 = vpop.f32.mrb[0].mxu0
    %v144 = vadd.f32 %v96, %v143
    %v145 = vpop.f32.mrb[0].mxu0
    %v146 = vpop.f32.mrb[0].mxu0
    %v147 = vpop.f32.mrb[0].mxu0
    %148 = vdwg.mxu0
    %vm149 = vcmask 261120
    %v150 = vsel %vm149, %v144, 0.0
    %151 = vadd.xlane.f32.xlu0 %v150
    %v152 = vpop.xlane.xlu0 %151
    %v153 = vrcp.pop 32.0
    %v154 = vmul.f32 %v152, %v153
    %v155 = vsub.f32 %v144, %v154
    %v156 = vmul.f32 %v155, %v155
    %v157 = vsel %vm149, %v156, 0.0
    %158 = vadd.xlane.f32.xlu0 %v157
    %v159 = vpop.xlane.xlu0 %158
    %v160 = vmul.f32 %v159, %v153
    %v161 = vadd.f32 %v160, 1e-05
    %v162 = vrsqrt.pop %v161
    %v164 = vlaneseq
    %v165 = vshrl.u32 %v164, 7
    %v166 = vsub.s32 0, %v165
    %v167 = vrot.slane %v89, %v166
    %v169 = vmul.f32 %v167, %v162
    %v170 = vmul.f32 %v155, %v169
    %v172 = vlaneseq
    %v173 = vshrl.u32 %v172, 7
    %v174 = vsub.s32 0, %v173
    %v175 = vrot.slane %v90, %v174
    %v177 = vadd.f32 %v170, %v175
    %v178 = vmax.f32 %v177, 0.0
    %v179 = vld [vmem:[%s5] sm:$0xf]
    %v180 = vld [vmem:[%s5 + $0x4] sm:$0xf]
    %v181 = vld [vmem:[%s5 + $0x8] sm:$0xf]
    %v182 = vld [vmem:[%s5 + $0xc] sm:$0xf]
    %v183 = vld [vmem:[#allocation7] sm:$0x1]
    %v184 = vld [vmem:[%s7] sm:$0x1]
    %v185 = vld [vmem:[%s8] sm:$0x1]
    %v186 = vpack.c.bf16 %v178, %v178
    %v188 = vlaneseq
    %v189 = vshrl.u32 %v188, 7
    %v190 = vsub.s32 0, %v189
    %v191 = vrot.slane %v183, %v190
    %v197 = vunpack.c.l.b16 %v179
    %v198 = vunpack.c.l.b16 %v180
    %v199 = vunpack.c.l.b16 %v181
    %v200 = vunpack.c.l.b16 %v182
    %v201 = vpack.c.b16 %v198, %v197
    %v202 = vpack.c.b16 %v200, %v199
    %v206 = vsel %vm149, %v186, 0
    %208 = vmatprep.subr.bf16.mxu0 0
    %209 = vmatpush1.bf16.msra.mxu0 %v201
    %210 = vmatprep.subr.bf16.mxu0 0
    %211 = vmatpush1.bf16.msra.mxu0 %v202
    %212 = vmatprep.subr.bf16.mxu0 0
    %213 = vmatpush1.bf16.msra.mxu0 0
    %214 = vmatprep.subr.bf16.mxu0 0
    %215 = vmatpush1.bf16.msra.mxu0 0
    %216 = vmatprep.subr.bf16.mxu0 0
    %217 = vmatpush1.bf16.msra.mxu0 0
    %218 = vmatprep.subr.bf16.mxu0 0
    %219 = vmatpush1.bf16.msra.mxu0 0
    %220 = vmatprep.subr.bf16.mxu0 0
    %221 = vmatpush1.bf16.msra.mxu0 0
    %222 = vmatprep.subr.bf16.mxu0 0
    %223 = vmatpush1.bf16.msra.mxu0 0
    %224 = vmatprep.subr.bf16.mxu0 0
    %225 = vmatpush1.bf16.msra.mxu0 0
    %226 = vmatprep.subr.bf16.mxu0 0
    %227 = vmatpush1.bf16.msra.mxu0 0
    %228 = vmatprep.subr.bf16.mxu0 0
    %229 = vmatpush1.bf16.msra.mxu0 0
    %230 = vmatprep.subr.bf16.mxu0 0
    %231 = vmatpush1.bf16.msra.mxu0 0
    %232 = vmatprep.subr.bf16.mxu0 0
    %233 = vmatpush1.bf16.msra.mxu0 0
    %234 = vmatprep.subr.bf16.mxu0 0
    %235 = vmatpush1.bf16.msra.mxu0 0
    %236 = vmatprep.subr.bf16.mxu0 0
    %237 = vmatpush1.bf16.msra.mxu0 0
    %238 = vmatprep.subr.bf16.mxu0 0
    %239 = vmatpush1.bf16.msra.mxu0 0
    %240 = vmatprep.mubr.bf16.mxu0 0
    %241 = vmatmul.mubr.bf16.gmra.mrb[0].mxu0 %v206
    %v242 = vpop.f32.mrb[0].mxu0
    %v243 = vadd.f32 %v191, %v242
    %v244 = vpop.f32.mrb[0].mxu0
    %v245 = vpop.f32.mrb[0].mxu0
    %v246 = vpop.f32.mrb[0].mxu0
    %247 = vdwg.mxu0
    %v248 = vsel %vm149, %v243, 0.0
    %249 = vadd.xlane.f32.xlu0 %v248
    %v250 = vpop.xlane.xlu0 %249
    %v251 = vmul.f32 %v250, %v153
    %v252 = vsub.f32 %v243, %v251
    %v253 = vmul.f32 %v252, %v252
    %v254 = vsel %vm149, %v253, 0.0
    %255 = vadd.xlane.f32.xlu0 %v254
    %v256 = vpop.xlane.xlu0 %255
    %v257 = vmul.f32 %v256, %v153
    %v258 = vadd.f32 %v257, 1e-05
    %v259 = vrsqrt.pop %v258
    %v261 = vlaneseq
    %v262 = vshrl.u32 %v261, 7
    %v263 = vsub.s32 0, %v262
    %v264 = vrot.slane %v184, %v263
    %v266 = vmul.f32 %v264, %v259
    %v267 = vmul.f32 %v252, %v266
    %v269 = vlaneseq
    %v270 = vshrl.u32 %v269, 7
    %v271 = vsub.s32 0, %v270
    %v272 = vrot.slane %v185, %v271
    %v274 = vadd.f32 %v267, %v272
    %v275 = vmax.f32 %v274, 0.0
    %v276 = vld [vmem:[%s9] sm:$0x7]
    %v277 = vlaneseq
    %v278 = vand.u32 %v277, 127
    %v279 = vld [vmem:[%s10] sm:$0x1]
    %v281 = vlaneseq
    %v282 = vshrl.u32 %v281, 7
    %v283 = vsub.s32 0, %v282
    %v284 = vrot.slane %v279, %v283
    %v286 = vlaneseq
    %v287 = vshrl.u32 %v286, 7
    %v288 = vsub.s32 0, %v287
    %v289 = vrot.slane %v276, %v288
    %v290 = vmul.f32 %v275, %v289
    %v291 = vsel %vm149, %v290, 0.0
    %292 = vadd.xlane.f32.xlu0 %v291
    %v293 = vpop.xlane.xlu0 %292
    %vm294 = vcmp.eq.s32.totalorder %v278, 0
    %v295 = vsel %vm294, %v293, 0.0
    %v296 = vadd.f32 %v284, %v295
    %v297 = vlaneseq
    %v298 = vshrl.u32 %v297, 7
    %v299 = vsub.s32 1, %v298
    %v300 = vrot.slane %v276, %v299
    %v301 = vmul.f32 %v275, %v300
    %v302 = vsel %vm149, %v301, 0.0
    %303 = vadd.xlane.f32.xlu0 %v302
    %v304 = vpop.xlane.xlu0 %303
    %vm305 = vcmp.eq.s32.totalorder %v278, 1
    %v306 = vsel %vm305, %v304, 0.0
    %v307 = vadd.f32 %v296, %v306
    %v308 = vlaneseq
    %v309 = vshrl.u32 %v308, 7
    %v310 = vsub.s32 2, %v309
    %v311 = vrot.slane %v276, %v310
    %v312 = vmul.f32 %v275, %v311
    %v313 = vsel %vm149, %v312, 0.0
    %314 = vadd.xlane.f32.xlu0 %v313
    %v315 = vpop.xlane.xlu0 %314
    %vm316 = vcmp.eq.s32.totalorder %v278, 2
    %v317 = vsel %vm316, %v315, 0.0
    %v318 = vadd.f32 %v307, %v317
    %v319 = vtanh.pop %v318
    %vm320 = vcmask 23552
    %321 = vst.msk [vmem:[%s11] sm:$0xff] %vm320, %v319
    // Predicated region
    $region62: #{tpu_custom_call.1} parent=1 // pred_check
      _
    $region63: #{tpu_custom_call.1} parent=1 // pred_check_branch
      %323 = sbr.rel (0) target = $region65
    $region64: #{tpu_custom_call.1} parent=1 // pred_region
      _
    $region65: #{tpu_custom_call.1} parent=1 // pred_fallthru
      _
    // Predicated region
    $region66: #{tpu_custom_call.1} parent=1 // pred_check
      _
    $region67: #{tpu_custom_call.1} parent=1 // pred_check_branch
      %325 = sbr.rel (0) target = $region69
    $region68: #{tpu_custom_call.1} parent=1 // pred_region
      _
    $region69: #{tpu_custom_call.1} parent=1 // pred_fallthru
      _
    %326 = vsyncpa [#allocation3], 1
    %327 = vsyncpa [#allocation5], 1
    %328 = vsyncpa [#allocation8], 1

</llo_original>
